<compile_context>
chip_gen: v7x
topology: tpu7x:2x2x1
jax: 0.10.0
libtpu: 0.0.40
codegen_flags: <defaults>
</compile_context>

<pallas_src>
import functools

import jax
import jax.numpy as jnp
from jax.experimental import pallas as pl
from jax.experimental.pallas import tpu as pltpu

H = 256            # hidden width of every layer
_MAX_TILE = 512    # max rows per batch tile (activations ~3-4 MiB << VMEM)
_SMALL_BATCH = 128 # at/below this (rounded to 16): latency path, grid over heads


def _round_up(x, m):
    return (x + m - 1) // m * m


# --------------------------------------------------------------------------
# Kernels
# --------------------------------------------------------------------------

def _critic_fused_kernel(sa_ref, w1_ref, w2_ref, w22_ref, w3_ref, b_ref, q_ref):
    """One batch tile; both Q-heads fused (layer-1 is one N=512 matmul)."""
    sa = sa_ref[...]                                        # (bm, S+A) bf16
    b = b_ref[...]                                          # (4, 2H)   f32

    h = jnp.dot(sa, w1_ref[...], preferred_element_type=jnp.float32) + b[0:1, :]
    h = jnp.maximum(h, 0.0).astype(jnp.bfloat16)            # (bm, 2H)
    h1, h2 = h[:, :H], h[:, H:]

    g1 = jnp.maximum(jnp.dot(h1, w2_ref[0], preferred_element_type=jnp.float32)
                     + b[1:2, :H], 0.0).astype(jnp.bfloat16)
    g2 = jnp.maximum(jnp.dot(h2, w2_ref[1], preferred_element_type=jnp.float32)
                     + b[1:2, H:], 0.0).astype(jnp.bfloat16)

    k1 = jnp.maximum(jnp.dot(g1, w22_ref[0], preferred_element_type=jnp.float32)
                     + b[2:3, :H], 0.0)
    k2 = jnp.maximum(jnp.dot(g2, w22_ref[1], preferred_element_type=jnp.float32)
                     + b[2:3, H:], 0.0)

    # Final 256 -> 1 per head on the VPU/XLU (no N=1 MXU matmuls).
    q1 = jnp.sum(k1 * w3_ref[0], axis=-1, keepdims=True) + b[3:4, 0:1]
    q2 = jnp.sum(k2 * w3_ref[1], axis=-1, keepdims=True) + b[3:4, H:H + 1]

    # Assemble (bm, 2) in-register and issue a single store.
    lane = jax.lax.broadcasted_iota(jnp.int32, (q1.shape[0], 2), dimension=1)
    q_ref[...] = jnp.where(lane == 0, q1, q2).astype(q_ref.dtype)


def _critic_head_kernel(sa_ref, w1_ref, w2_ref, w22_ref, w3_ref, b_ref, q_ref):
    """Latency path: one Q-head per grid step (grid=(2,), 'parallel') so the
    two heads shard across both TensorCores on v7x."""
    sa = sa_ref[...]                                        # (bm, S+A) bf16
    b = b_ref[...]                                          # (4, H)    f32

    h = jnp.maximum(jnp.dot(sa, w1_ref[...], preferred_element_type=jnp.float32)
                    + b[0:1, :], 0.0).astype(jnp.bfloat16)
    g = jnp.maximum(jnp.dot(h, w2_ref[0], preferred_element_type=jnp.float32)
                    + b[1:2, :], 0.0).astype(jnp.bfloat16)
    k = jnp.maximum(jnp.dot(g, w22_ref[0], preferred_element_type=jnp.float32)
                    + b[2:3, :], 0.0)
    q = jnp.sum(k * w3_ref[0], axis=-1, keepdims=True) + b[3:4, 0:1]
    q_ref[0] = q.astype(q_ref.dtype)


# --------------------------------------------------------------------------
# Parameter packing (do ONCE, outside the training/eval loop)
# --------------------------------------------------------------------------

def pack_critic_params(params, weight_dtype=jnp.bfloat16):
    """Pack (in,out)-layout weights / (1,out) biases into the kernel layout.
    Head h occupies columns [h*H:(h+1)*H] of every concatenated array, so the
    same packing serves both the fused-head and per-head kernels."""
    w1 = jnp.concatenate([params["w1"], params["w4"]], axis=1)        # (S+A, 2H)
    b0 = jnp.concatenate([params["b1"], params["b4"]], axis=1)        # (1, 2H)
    b1 = jnp.concatenate([params["b2"], params["b5"]], axis=1)
    b2 = jnp.concatenate([params["b2_2"], params["b5_2"]], axis=1)
    zpad = jnp.zeros((1, H - 1), jnp.float32)
    # Final-layer scalar biases: b3 at column 0, b6 at column H.
    b3 = jnp.concatenate([params["b3"], zpad, params["b6"], zpad], axis=1)
    return {
        "w1":   w1.astype(weight_dtype),                                     # (S+A, 2H)
        "w2":   jnp.stack([params["w2"], params["w5"]]).astype(weight_dtype),     # (2,H,H)
        "w2_2": jnp.stack([params["w2_2"], params["w5_2"]]).astype(weight_dtype), # (2,H,H)
        "w3":   jnp.stack([params["w3"].T, params["w6"].T]).astype(jnp.float32),  # (2,1,H)
        "b":    jnp.concatenate([b0, b1, b2, b3], axis=0).astype(jnp.float32),    # (4,2H)
    }


# --------------------------------------------------------------------------
# Forward wrapper
# --------------------------------------------------------------------------

@jax.jit
def critic_forward(state, action, packed):
    """Equivalent of Critic.forward(state, action) -> (q1, q2)."""
    b = state.shape[0]
    # Trivial XLA concat + bf16 cast in the wrapper (halves input HBM traffic
    # and fuses the two layer-1 matmuls into one).
    sa = jnp.concatenate([state, action], axis=-1).astype(jnp.bfloat16)
    SA = sa.shape[1]

    if _round_up(b, 16) <= _SMALL_BATCH:
        # ---------------- latency path: grid=(2,) over Q-heads -------------
        bm = _round_up(b, 16)
        if bm != b:
            sa = jnp.pad(sa, ((0, bm - b), (0, 0)))
        q = pl.pallas_call(
            _critic_head_kernel,
            out_shape=jax.ShapeDtypeStruct((2, bm, 1), jnp.float32),
            grid=(2,),
            in_specs=[
                pl.BlockSpec((bm, SA), lambda h: (0, 0)),
                pl.BlockSpec((SA, H), lambda h: (0, h)),
                pl.BlockSpec((1, H, H), lambda h: (h, 0, 0)),
                pl.BlockSpec((1, H, H), lambda h: (h, 0, 0)),
                pl.BlockSpec((1, 1, H), lambda h: (h, 0, 0)),
                pl.BlockSpec((4, H), lambda h: (0, h)),
            ],
            out_specs=pl.BlockSpec((1, bm, 1), lambda h: (h, 0, 0)),
            compiler_params=pltpu.CompilerParams(
                dimension_semantics=("parallel",)),
        )(sa, packed["w1"], packed["w2"], packed["w2_2"], packed["w3"],
          packed["b"])
        return q[0, :b], q[1, :b]

    # ------------- throughput path: >=2 batch tiles, heads fused -----------
    b16 = _round_up(b, 16)
    bm = max(16, min(_MAX_TILE, _round_up(-(-b16 // 2), 16)))  # >=2 tiles, <=512 rows
    bp = _round_up(b, bm)
    if bp != b:
        sa = jnp.pad(sa, ((0, bp - b), (0, 0)))

    q = pl.pallas_call(
        _critic_fused_kernel,
        out_shape=jax.ShapeDtypeStruct((bp, 2), jnp.float32),
        grid=(bp // bm,),
        in_specs=[
            pl.BlockSpec((bm, SA), lambda i: (i, 0)),
            pl.BlockSpec((SA, 2 * H), lambda i: (0, 0)),
            pl.BlockSpec((2, H, H), lambda i: (0, 0, 0)),
            pl.BlockSpec((2, H, H), lambda i: (0, 0, 0)),
            pl.BlockSpec((2, 1, H), lambda i: (0, 0, 0)),
            pl.BlockSpec((4, 2 * H), lambda i: (0, 0)),
        ],
        out_specs=pl.BlockSpec((bm, 2), lambda i: (i, 0)),
        compiler_params=pltpu.CompilerParams(
            dimension_semantics=("parallel",)),
    )(sa, packed["w1"], packed["w2"], packed["w2_2"], packed["w3"],
      packed["b"])
    return q[:b, 0:1], q[:b, 1:2]


def critic_q1(state, action, packed):
    """Equivalent of Critic.Q1."""
    return critic_forward(state, action, packed)[0]


# --------------------------------------------------------------------------
# Init + references (for the self-test)
# --------------------------------------------------------------------------

def init_critic_params(key, state_dim, action_dim):
    """torch.nn.Linear default init: W, b ~ U(-1/sqrt(fan_in), 1/sqrt(fan_in)).
    Weights stored transposed vs. PyTorch, i.e. (in_features, out_features)."""
    in_dim = state_dim + action_dim
    dims = {
        "1":   (in_dim, H), "2":   (H, H), "2_2": (H, H), "3": (H, 1),
        "4":   (in_dim, H), "5":   (H, H), "5_2": (H, H), "6": (H, 1),
    }
    params = {}
    for name, (fan_in, fan_out) in dims.items():
        key, kw, kb = jax.random.split(key, 3)
        bound = 1.0 / jnp.sqrt(jnp.float32(fan_in))
        params[f"w{name}"] = jax.random.uniform(
            kw, (fan_in, fan_out), jnp.float32, -bound, bound)
        params[f"b{name}"] = jax.random.uniform(
            kb, (1, fan_out), jnp.float32, -bound, bound)
    return params


def critic_reference_packed(state, action, packed):
    """Plain-JAX mirror of the kernel numerics (bf16 weights, f32 accum).
    Both kernel paths compute exactly these ops."""
    sa = jnp.concatenate([state, action], axis=-1).astype(jnp.bfloat16)
    b = packed["b"]
    h = jnp.dot(sa, packed["w1"], preferred_element_type=jnp.float32) + b[0:1, :]
    h = jnp.maximum(h, 0.0).astype(jnp.bfloat16)
    h1, h2 = h[:, :H], h[:, H:]
    g1 = jnp.maximum(jnp.dot(h1, packed["w2"][0],
                             preferred_element_type=jnp.float32) + b[1:2, :H], 0.0)
    g2 = jnp.maximum(jnp.dot(h2, packed["w2"][1],
                             preferred_element_type=jnp.float32) + b[1:2, H:], 0.0)
    g1 = g1.astype(jnp.bfloat16)
    g2 = g2.astype(jnp.bfloat16)
    k1 = jnp.maximum(jnp.dot(g1, packed["w2_2"][0],
                             preferred_element_type=jnp.float32) + b[2:3, :H], 0.0)
    k2 = jnp.maximum(jnp.dot(g2, packed["w2_2"][1],
                             preferred_element_type=jnp.float32) + b[2:3, H:], 0.0)
    q1 = jnp.sum(k1 * packed["w3"][0], axis=-1, keepdims=True) + b[3:4, 0:1]
    q2 = jnp.sum(k2 * packed["w3"][1], axis=-1, keepdims=True) + b[3:4, H:H + 1]
    return q1, q2


def critic_reference_f32(state, action, params):
    """Full-f32 PyTorch-semantics reference (unpacked params)."""
    sa = jnp.concatenate([state, action], axis=-1).astype(jnp.float32)

    def head(names):
        h = sa
        for i, n in enumerate(names):
            h = h @ params[f"w{n}"] + params[f"b{n}"]
            if i < len(names) - 1:
                h = jnp.maximum(h, 0.0)
        return h

    return head(["1", "2", "2_2", "3"]), head(["4", "5", "5_2", "6"])


# --------------------------------------------------------------------------

if __name__ == "__main__":
    key = jax.random.PRNGKey(0)
    k_param, k_s1, k_a1, k_s2, k_a2 = jax.random.split(key, 5)

    state_dim, action_dim = 24, 8
    params = init_critic_params(k_param, state_dim, action_dim)
    packed = pack_critic_params(params)   # pre-pack once (bf16 weights)

    # ---- small (rollout / latency) batch -> head-split path, grid=(2,) ----
    batch = 8
    state = jax.random.normal(k_s1, (batch, state_dim), jnp.float32)
    action = jax.random.normal(k_a1, (batch, action_dim), jnp.float32)

    q1, q2 = jax.block_until_ready(critic_forward(state, action, packed))
    assert q1.shape == (batch, 1) and q2.shape == (batch, 1)

    q1_m, q2_m = critic_reference_packed(state, action, packed)
    assert jnp.allclose(q1, q1_m, atol=2e-3, rtol=2e-3)
    assert jnp.allclose(q2, q2_m, atol=2e-3, rtol=2e-3)

    q1_f, q2_f = critic_reference_f32(state, action, params)
    assert jnp.allclose(q1, q1_f, atol=5e-2, rtol=5e-2)
    assert jnp.allclose(q2, q2_f, atol=5e-2, rtol=5e-2)

    # ---- larger (training) batch -> fused-head batched path, grid=(2,) ----
    batch2 = 200
    state2 = jax.random.normal(k_s2, (batch2, state_dim), jnp.float32)
    action2 = jax.random.normal(k_a2, (batch2, action_dim), jnp.float32)

    p1, p2 = jax.block_until_ready(critic_forward(state2, action2, packed))
    assert p1.shape == (batch2, 1) and p2.shape == (batch2, 1)

    p1_m, p2_m = critic_reference_packed(state2, action2, packed)
    assert jnp.allclose(p1, p1_m, atol=2e-3, rtol=2e-3)
    assert jnp.allclose(p2, p2_m, atol=2e-3, rtol=2e-3)

    print("KERNEL_OK")
</pallas_src>

<mosaic_0001>
module attributes {stable_mosaic.version = 11 : i64} {
  func.func @_critic_head_kernel(%arg0: i32, %arg1: memref<16x32xbf16, #tpu.memory_space<vmem>>, %arg2: memref<32x256xbf16, #tpu.memory_space<vmem>>, %arg3: memref<1x256x256xbf16, #tpu.memory_space<vmem>>, %arg4: memref<1x256x256xbf16, #tpu.memory_space<vmem>>, %arg5: memref<1x1x256xf32, #tpu.memory_space<vmem>>, %arg6: memref<4x256xf32, #tpu.memory_space<vmem>>, %arg7: memref<1x16x1xf32, #tpu.memory_space<vmem>>) attributes {dimension_semantics = [#tpu.dimension_semantics<parallel>], iteration_bounds = array<i64: 2>, scalar_prefetch = 0 : i64, scratch_operands = 0 : i64, tpu.core_type = #tpu.core_type<tc>, window_params = [{pipeline_mode = #tpu.pipeline_mode<synchronous>, transform_indices = @transform_0, window_bounds = array<i64: 16, 32>}, {transform_indices = @transform_1, window_bounds = array<i64: 32, 256>}, {transform_indices = @transform_2, window_bounds = array<i64: 1, 256, 256>}, {transform_indices = @transform_3, window_bounds = array<i64: 1, 256, 256>}, {transform_indices = @transform_4, window_bounds = array<i64: 1, 1, 256>}, {transform_indices = @transform_5, window_bounds = array<i64: 4, 256>}, {transform_indices = @transform_6, window_bounds = array<i64: 1, 16, 1>}]} {
    %c0 = arith.constant 0 : index
    %c0_0 = arith.constant 0 : index
    %0 = vector.load %arg1[%c0, %c0_0] : memref<16x32xbf16, #tpu.memory_space<vmem>>, vector<16x32xbf16>
    %c0_1 = arith.constant 0 : index
    %c0_2 = arith.constant 0 : index
    %1 = vector.load %arg6[%c0_1, %c0_2] : memref<4x256xf32, #tpu.memory_space<vmem>>, vector<4x256xf32>
    %c0_3 = arith.constant 0 : index
    %c0_4 = arith.constant 0 : index
    %2 = vector.load %arg2[%c0_3, %c0_4] : memref<32x256xbf16, #tpu.memory_space<vmem>>, vector<32x256xbf16>
    %cst = arith.constant dense<0.000000e+00> : vector<16x256xf32>
    %3 = tpu.matmul %0, %2, %cst {dimension_numbers = #tpu.dot_dimension_numbers<[1], [0], [0], [1], [0, 0, 1, 1], [], []>} : vector<16x32xbf16>, vector<32x256xbf16>, vector<16x256xf32> -> vector<16x256xf32>
    %4 = vector.extract_strided_slice %1 {offsets = [0, 0], sizes = [1, 256], strides = [1, 1]} : vector<4x256xf32> to vector<1x256xf32>
    %5 = vector.broadcast %4 : vector<1x256xf32> to vector<16x256xf32>
    %6 = arith.addf %3, %5 : vector<16x256xf32>
    %cst_5 = arith.constant 0.000000e+00 : f32
    %7 = vector.broadcast %cst_5 : f32 to vector<16x256xf32>
    %8 = arith.maximumf %6, %7 : vector<16x256xf32>
    %9 = arith.truncf %8 : vector<16x256xf32> to vector<16x256xbf16>
    %c0_6 = arith.constant 0 : index
    %c0_7 = arith.constant 0 : index
    %c0_8 = arith.constant 0 : index
    %10 = vector.load %arg3[%c0_6, %c0_7, %c0_8] : memref<1x256x256xbf16, #tpu.memory_space<vmem>>, vector<1x256x256xbf16>
    %11 = vector.shape_cast %10 : vector<1x256x256xbf16> to vector<256x256xbf16>
    %cst_9 = arith.constant dense<0.000000e+00> : vector<16x256xf32>
    %12 = tpu.matmul %9, %11, %cst_9 {dimension_numbers = #tpu.dot_dimension_numbers<[1], [0], [0], [1], [0, 0, 1, 1], [], []>} : vector<16x256xbf16>, vector<256x256xbf16>, vector<16x256xf32> -> vector<16x256xf32>
    %13 = vector.extract_strided_slice %1 {offsets = [1, 0], sizes = [1, 256], strides = [1, 1]} : vector<4x256xf32> to vector<1x256xf32>
    %14 = vector.broadcast %13 : vector<1x256xf32> to vector<16x256xf32>
    %15 = arith.addf %12, %14 : vector<16x256xf32>
    %cst_10 = arith.constant 0.000000e+00 : f32
    %16 = vector.broadcast %cst_10 : f32 to vector<16x256xf32>
    %17 = arith.maximumf %15, %16 : vector<16x256xf32>
    %18 = arith.truncf %17 : vector<16x256xf32> to vector<16x256xbf16>
    %c0_11 = arith.constant 0 : index
    %c0_12 = arith.constant 0 : index
    %c0_13 = arith.constant 0 : index
    %19 = vector.load %arg4[%c0_11, %c0_12, %c0_13] : memref<1x256x256xbf16, #tpu.memory_space<vmem>>, vector<1x256x256xbf16>
    %20 = vector.shape_cast %19 : vector<1x256x256xbf16> to vector<256x256xbf16>
    %cst_14 = arith.constant dense<0.000000e+00> : vector<16x256xf32>
    %21 = tpu.matmul %18, %20, %cst_14 {dimension_numbers = #tpu.dot_dimension_numbers<[1], [0], [0], [1], [0, 0, 1, 1], [], []>} : vector<16x256xbf16>, vector<256x256xbf16>, vector<16x256xf32> -> vector<16x256xf32>
    %22 = vector.extract_strided_slice %1 {offsets = [2, 0], sizes = [1, 256], strides = [1, 1]} : vector<4x256xf32> to vector<1x256xf32>
    %23 = vector.broadcast %22 : vector<1x256xf32> to vector<16x256xf32>
    %24 = arith.addf %21, %23 : vector<16x256xf32>
    %cst_15 = arith.constant 0.000000e+00 : f32
    %25 = vector.broadcast %cst_15 : f32 to vector<16x256xf32>
    %26 = arith.maximumf %24, %25 : vector<16x256xf32>
    %c0_16 = arith.constant 0 : index
    %c0_17 = arith.constant 0 : index
    %c0_18 = arith.constant 0 : index
    %27 = vector.load %arg5[%c0_16, %c0_17, %c0_18] : memref<1x1x256xf32, #tpu.memory_space<vmem>>, vector<1x1x256xf32>
    %28 = vector.shape_cast %27 : vector<1x1x256xf32> to vector<1x256xf32>
    %29 = vector.broadcast %28 : vector<1x256xf32> to vector<16x256xf32>
    %30 = arith.mulf %26, %29 : vector<16x256xf32>
    %cst_19 = arith.constant dense<0.000000e+00> : vector<16xf32>
    %31 = vector.multi_reduction <add>, %30, %cst_19 [1] : vector<16x256xf32> to vector<16xf32>
    %32 = vector.shape_cast %31 : vector<16xf32> to vector<16x1xf32>
    %33 = vector.extract_strided_slice %1 {offsets = [3, 0], sizes = [1, 1], strides = [1, 1]} : vector<4x256xf32> to vector<1x1xf32>
    %34 = vector.broadcast %33 : vector<1x1xf32> to vector<16x1xf32>
    %35 = arith.addf %32, %34 : vector<16x1xf32>
    %c0_20 = arith.constant 0 : index
    %c0_21 = arith.constant 0 : index
    %c0_22 = arith.constant 0 : index
    %36 = vector.load %arg7[%c0_20, %c0_21, %c0_22] : memref<1x16x1xf32, #tpu.memory_space<vmem>>, vector<1x16x1xf32>
    %37 = vector.shape_cast %36 : vector<1x16x1xf32> to vector<16x1xf32>
    %38 = vector.shape_cast %35 : vector<16x1xf32> to vector<1x16x1xf32>
    tpu.vector_store %arg7[%c0_20, %c0_21, %c0_22], %38 {strides = array<i32>} : memref<1x16x1xf32, #tpu.memory_space<vmem>>, vector<1x16x1xf32>,
    return
  }
  func.func @transform_0(%arg0: i32) -> (i32, i32) {
    %c0_i32 = arith.constant 0 : i32
    %c0_i32_0 = arith.constant 0 : i32
    %c0_i32_1 = arith.constant 0 : i32
    return %c0_i32, %c0_i32_0 : i32, i32
  }
  func.func @transform_1(%arg0: i32) -> (i32, i32) {
    %c0_i32 = arith.constant 0 : i32
    %c0_i32_0 = arith.constant 0 : i32
    return %c0_i32, %arg0 : i32, i32
  }
  func.func @transform_2(%arg0: i32) -> (i32, i32, i32) {
    %c0_i32 = arith.constant 0 : i32
    %c0_i32_0 = arith.constant 0 : i32
    %c0_i32_1 = arith.constant 0 : i32
    return %arg0, %c0_i32, %c0_i32_0 : i32, i32, i32
  }
  func.func @transform_3(%arg0: i32) -> (i32, i32, i32) {
    %c0_i32 = arith.constant 0 : i32
    %c0_i32_0 = arith.constant 0 : i32
    %c0_i32_1 = arith.constant 0 : i32
    return %arg0, %c0_i32, %c0_i32_0 : i32, i32, i32
  }
  func.func @transform_4(%arg0: i32) -> (i32, i32, i32) {
    %c0_i32 = arith.constant 0 : i32
    %c0_i32_0 = arith.constant 0 : i32
    %c0_i32_1 = arith.constant 0 : i32
    return %arg0, %c0_i32, %c0_i32_0 : i32, i32, i32
  }
  func.func @transform_5(%arg0: i32) -> (i32, i32) {
    %c0_i32 = arith.constant 0 : i32
    %c0_i32_0 = arith.constant 0 : i32
    return %c0_i32, %arg0 : i32, i32
  }
  func.func @transform_6(%arg0: i32) -> (i32, i32, i32) {
    %c0_i32 = arith.constant 0 : i32
    %c0_i32_0 = arith.constant 0 : i32
    %c0_i32_1 = arith.constant 0 : i32
    return %arg0, %c0_i32, %c0_i32_0 : i32, i32, i32
  }
}

</mosaic_0001>

<llo_original>
// kernel: critic_forward.1
$region0: #{critic_forward.1}
  #allocation0 [shape = 'u32[]', space=smem, size = 0x4, offset = 0x4, fixed_abs, tag = 'smem constant byte address 0x4 - core index']
  #allocation1 [shape = 'u32[144,128]{1,0:T(1,128)}', space=vmem, size = 0x12000, scoped, tag = 'internal scratch']
  %s0 = inlined_call_operand.vmem [shape: bf16[16,32], index: 0, kind: input, shape index: {}]
  %s1 = inlined_call_operand.hbm [shape: bf16[32,512], index: 1, kind: input, shape index: {}]
  %s2 = inlined_call_operand.hbm [shape: bf16[2,256,256], index: 2, kind: input, shape index: {}]
  %s3 = inlined_call_operand.hbm [shape: bf16[2,256,256], index: 3, kind: input, shape index: {}]
  %s4 = inlined_call_operand.vmem [shape: f32[2,1,256], index: 4, kind: input, shape index: {}]
  %s5 = inlined_call_operand.vmem [shape: f32[4,512], index: 5, kind: input, shape index: {}]
  %s6 = inlined_call_operand.vmem [shape: f32[2,16,1], index: 6, kind: output, shape index: {}]
  %s7 = sld [smem:[#allocation0]]
  $region69: #{critic_forward.1} parent=0
    _
  %s9 = ssub.s32 1, %s7
  %s10 = scalar_select 0, %s9, %s7
  $region1: #{critic_forward.1} parent=0
    #allocation2 [shape = 'u8[32768]{0}', space=vmem, size = 0x8000, scoped, tag = 'input window, operand 1']
    #allocation3 [shape = 's32[2]{0}', space=sflag, size = 0x8, scoped, tag = 'scoped memory for critic_forward.1']
    #allocation4 [shape = 'u8[262144]{0}', space=vmem, size = 0x40000, scoped, tag = 'input window, operand 2']
    #allocation5 [shape = 's32[2]{0}', space=sflag, size = 0x8, scoped, tag = 'scoped memory for critic_forward.1']
    #allocation6 [shape = 'u8[262144]{0}', space=vmem, size = 0x40000, scoped, tag = 'input window, operand 3']
    %11 = vsyncpa [#allocation3], 0
    %s12 = scalar_lea.sflag [#allocation3], 1
    %13 = vsyncpa %s12, 0
    %14 = vsyncpa [#allocation5], 0
    %s15 = scalar_lea.sflag [#allocation5], 1
    %16 = vsyncpa %s15, 0
    loop: start=0, step=1, limit=4
    $region2: #{critic_forward.1} parent=1 // loop_pre_header
      _
    $region3: #{critic_forward.1} parent=1 // loop_header
      %s18 = sphi 0, %s22
      %p19 = scmp.ge.s32.totalorder %s18, 4
      %s26 = sphi 0, %s26
      %s28 = sphi 0, %s26
      %s29 = sphi 0, %s28
      %s43 = sphi 0, %s29
      %s49 = sphi 0, %s51
      %s52 = sphi 0, %s49
      %s53 = sphi 0, %s52
      %s69 = sphi 0, %s53
      %s75 = sphi 0, %s77
      %s78 = sphi 0, %s75
      %s79 = sphi 0, %s78
      %s95 = sphi 0, %s79
      %s101 = sphi 0, %s103
      %s104 = sphi 0, %s101
      %s105 = sphi 0, %s104
      %s121 = sphi 0, %s105
      %s127 = sphi 0, %s129
      %s130 = sphi 0, %s127
      %s131 = sphi 0, %s130
      %s147 = sphi 0, %s131
      %s153 = sphi 0, %s155
      %s156 = sphi 0, %s153
      %s157 = sphi 0, %s156
      %s173 = sphi 0, %s157
      %s179 = sphi 0, %s181
      %s182 = sphi 0, %s179
      %s183 = sphi 0, %s182
      %s199 = sphi 0, %s183
    $region4: #{critic_forward.1} parent=1 // loop_header_branch
      %21 = sbr.rel (%p19) target = $region8
    $region5: #{critic_forward.1} parent=1 // loop_body
      %s23 = ssub.s32 %s18, 1
      %s24 = ssub.s32 %s18, 2
      %s25 = sadd.s32 %s18, 1
      %s27 = sadd.s32 %s26, 1
      %p30 = scmp.eq.s32.totalorder %s18, 1
      %p31 = scmp.ne.s32.totalorder %s26, %s28
      %p32 = scmp.eq.s32.totalorder %s18, 0
      %p33 = por %p31, %p32
      %p34 = scmp.ne.s32.totalorder %s26, %s28
      %p35 = scmp.eq.s32.totalorder %s23, 1
      %p36 = por %p34, %p35
      %p37 = scmp.ne.s32.totalorder %s28, %s29
      %p38 = scmp.eq.s32.totalorder %s23, 0
      %p39 = por %p37, %p38
      %p40 = scmp.ne.s32.totalorder %s28, %s29
      %p41 = scmp.eq.s32.totalorder %s24, 1
      %p42 = por %p40, %p41
      %p44 = scmp.ne.s32.totalorder %s29, %s43
      %p45 = scmp.eq.s32.totalorder %s24, 0
      %p46 = por %p44, %p45
      %s47 = ssub.s32 %s18, %s25
      %p48 = scmp.eq.s32.totalorder %s47, 0
      %s50 = sadd.s32 %s49, 1
      %s51 = scalar_select %p48, %s49, %s50
      %p54 = pneg %p48
      %p55 = scmp.eq.s32.totalorder %s18, 1
      %p56 = por %p54, %p55
      %p57 = scmp.ne.s32.totalorder %s49, %s52
      %p58 = scmp.eq.s32.totalorder %s18, 0
      %p59 = por %p57, %p58
      %p60 = scmp.ne.s32.totalorder %s49, %s52
      %p61 = scmp.eq.s32.totalorder %s23, 1
      %p62 = por %p60, %p61
      %p63 = scmp.ne.s32.totalorder %s52, %s53
      %p64 = scmp.eq.s32.totalorder %s23, 0
      %p65 = por %p63, %p64
      %p66 = scmp.ne.s32.totalorder %s52, %s53
      %p67 = scmp.eq.s32.totalorder %s24, 1
      %p68 = por %p66, %p67
      %p70 = scmp.ne.s32.totalorder %s53, %s69
      %p71 = scmp.eq.s32.totalorder %s24, 0
      %p72 = por %p70, %p71
      %s73 = ssub.s32 %s18, %s25
      %p74 = scmp.eq.s32.totalorder %s73, 0
      %s76 = sadd.s32 %s75, 1
      %s77 = scalar_select %p74, %s75, %s76
      %p80 = pneg %p74
      %p81 = scmp.eq.s32.totalorder %s18, 1
      %p82 = por %p80, %p81
      %p83 = scmp.ne.s32.totalorder %s75, %s78
      %p84 = scmp.eq.s32.totalorder %s18, 0
      %p85 = por %p83, %p84
      %p86 = scmp.ne.s32.totalorder %s75, %s78
      %p87 = scmp.eq.s32.totalorder %s23, 1
      %p88 = por %p86, %p87
      %p89 = scmp.ne.s32.totalorder %s78, %s79
      %p90 = scmp.eq.s32.totalorder %s23, 0
      %p91 = por %p89, %p90
      %p92 = scmp.ne.s32.totalorder %s78, %s79
      %p93 = scmp.eq.s32.totalorder %s24, 1
      %p94 = por %p92, %p93
      %p96 = scmp.ne.s32.totalorder %s79, %s95
      %p97 = scmp.eq.s32.totalorder %s24, 0
      %p98 = por %p96, %p97
      %s99 = ssub.s32 %s18, %s25
      %p100 = scmp.eq.s32.totalorder %s99, 0
      %s102 = sadd.s32 %s101, 1
      %s103 = scalar_select %p100, %s101, %s102
      %p106 = pneg %p100
      %p107 = scmp.eq.s32.totalorder %s18, 1
      %p108 = por %p106, %p107
      %p109 = scmp.ne.s32.totalorder %s101, %s104
      %p110 = scmp.eq.s32.totalorder %s18, 0
      %p111 = por %p109, %p110
      %p112 = scmp.ne.s32.totalorder %s101, %s104
      %p113 = scmp.eq.s32.totalorder %s23, 1
      %p114 = por %p112, %p113
      %p115 = scmp.ne.s32.totalorder %s104, %s105
      %p116 = scmp.eq.s32.totalorder %s23, 0
      %p117 = por %p115, %p116
      %p118 = scmp.ne.s32.totalorder %s104, %s105
      %p119 = scmp.eq.s32.totalorder %s24, 1
      %p120 = por %p118, %p119
      %p122 = scmp.ne.s32.totalorder %s105, %s121
      %p123 = scmp.eq.s32.totalorder %s24, 0
      %p124 = por %p122, %p123
      %s125 = ssub.s32 %s18, %s25
      %p126 = scmp.eq.s32.totalorder %s125, 0
      %s128 = sadd.s32 %s127, 1
      %s129 = scalar_select %p126, %s127, %s128
      %p132 = pneg %p126
      %p133 = scmp.eq.s32.totalorder %s18, 1
      %p134 = por %p132, %p133
      %p135 = scmp.ne.s32.totalorder %s127, %s130
      %p136 = scmp.eq.s32.totalorder %s18, 0
      %p137 = por %p135, %p136
      %p138 = scmp.ne.s32.totalorder %s127, %s130
      %p139 = scmp.eq.s32.totalorder %s23, 1
      %p140 = por %p138, %p139
      %p141 = scmp.ne.s32.totalorder %s130, %s131
      %p142 = scmp.eq.s32.totalorder %s23, 0
      %p143 = por %p141, %p142
      %p144 = scmp.ne.s32.totalorder %s130, %s131
      %p145 = scmp.eq.s32.totalorder %s24, 1
      %p146 = por %p144, %p145
      %p148 = scmp.ne.s32.totalorder %s131, %s147
      %p149 = scmp.eq.s32.totalorder %s24, 0
      %p150 = por %p148, %p149
      %s151 = ssub.s32 %s18, %s25
      %p152 = scmp.eq.s32.totalorder %s151, 0
      %s154 = sadd.s32 %s153, 1
      %s155 = scalar_select %p152, %s153, %s154
      %p158 = pneg %p152
      %p159 = scmp.eq.s32.totalorder %s18, 1
      %p160 = por %p158, %p159
      %p161 = scmp.ne.s32.totalorder %s153, %s156
      %p162 = scmp.eq.s32.totalorder %s18, 0
      %p163 = por %p161, %p162
      %p164 = scmp.ne.s32.totalorder %s153, %s156
      %p165 = scmp.eq.s32.totalorder %s23, 1
      %p166 = por %p164, %p165
      %p167 = scmp.ne.s32.totalorder %s156, %s157
      %p168 = scmp.eq.s32.totalorder %s23, 0
      %p169 = por %p167, %p168
      %p170 = scmp.ne.s32.totalorder %s156, %s157
      %p171 = scmp.eq.s32.totalorder %s24, 1
      %p172 = por %p170, %p171
      %p174 = scmp.ne.s32.totalorder %s157, %s173
      %p175 = scmp.eq.s32.totalorder %s24, 0
      %p176 = por %p174, %p175
      %s177 = ssub.s32 %s18, %s25
      %p178 = scmp.eq.s32.totalorder %s177, 0
      %s180 = sadd.s32 %s179, 1
      %s181 = scalar_select %p178, %s179, %s180
      %p184 = pneg %p178
      %p185 = scmp.eq.s32.totalorder %s18, 1
      %p186 = por %p184, %p185
      %p187 = scmp.ne.s32.totalorder %s179, %s182
      %p188 = scmp.eq.s32.totalorder %s18, 0
      %p189 = por %p187, %p188
      %p190 = scmp.ne.s32.totalorder %s179, %s182
      %p191 = scmp.eq.s32.totalorder %s23, 1
      %p192 = por %p190, %p191
      %p193 = scmp.ne.s32.totalorder %s182, %s183
      %p194 = scmp.eq.s32.totalorder %s23, 0
      %p195 = por %p193, %p194
      %p196 = scmp.ne.s32.totalorder %s182, %s183
      %p197 = scmp.eq.s32.totalorder %s24, 1
      %p198 = por %p196, %p197
      %p200 = scmp.ne.s32.totalorder %s183, %s199
      %p201 = scmp.eq.s32.totalorder %s24, 0
      %p202 = por %p200, %p201
      %p203 = scmp.le.s32.totalorder 1, %s18
      %p204 = scmp.lt.s32.totalorder %s18, 3
      %p205 = pnand %p203, %p204
      %p206 = pneg %p205
      // Predicated region
      $region9: #{critic_forward.1} parent=5 // pred_check
        _
      $region10: #{critic_forward.1} parent=5 // pred_check_branch
        %208 = sbr.rel (%p205) target = $region12
      $region11: #{critic_forward.1} parent=5 // pred_region
        %s209 = ssub.s32 %s18, 1
        // Predicated region
        $region13: #{critic_forward.1} parent=11 // pred_check
          %p210 = pneg %p39
        $region14: #{critic_forward.1} parent=11 // pred_check_branch
          %212 = sbr.rel (%p210) target = $region16
        $region15: #{critic_forward.1} parent=11 // pred_region
          _
        $region16: #{critic_forward.1} parent=11 // pred_fallthru
          _
      $region12: #{critic_forward.1} parent=5 // pred_fallthru
        _
      %p213 = scmp.lt.s32.totalorder %s18, 2
      // Predicated region
      $region17: #{critic_forward.1} parent=5 // pred_check
        %p214 = pneg %p213
      $region18: #{critic_forward.1} parent=5 // pred_check_branch
        %216 = sbr.rel (%p214) target = $region20
      $region19: #{critic_forward.1} parent=5 // pred_region
        // Predicated region
        $region21: #{critic_forward.1} parent=19 // pred_check
          %p217 = pneg %p59
        $region22: #{critic_forward.1} parent=19 // pred_check_branch
          %219 = sbr.rel (%p217) target = $region24
        $region23: #{critic_forward.1} parent=19 // pred_region
          %s220 = sand.u32 %s49, 1
          %s221 = scalar_lea.sflag [#allocation3], %s220
          %s222 = sand.u32 %s49, 1
          %s223 = smul.addr %s222, 32
          %s224 = scalar_lea.vmem [#allocation2], %s223
          %s225 = smul.u32 2, %s18
          %s227 = ssub.s32 512, 512
          %228 = vsyncadd %s221, %s227
          %s229 = smul.addr %s225, 64
          %s230 = scalar_lea.hbm %s1, %s229
          %s231 = sshll.u32 %s224, 4
          %s232 = int_to_ptr.vmem [resolvable:$true] %s231
          %237 = dma.hbm_to_vmem [thread:$0]  %s230, 512, %s232, %s221, 256, 128, 8
        $region24: #{critic_forward.1} parent=19 // pred_fallthru
          _
        // Predicated region
        $region25: #{critic_forward.1} parent=19 // pred_check
          %p238 = pneg %p85
        $region26: #{critic_forward.1} parent=19 // pred_check_branch
          %240 = sbr.rel (%p238) target = $region28
        $region27: #{critic_forward.1} parent=19 // pred_region
          %s241 = sand.u32 %s18, 1
          %s242 = scalar_lea.sflag [#allocation5], %s241
          %s243 = sand.u32 %s75, 1
          %s244 = smul.addr %s243, 256
          %s245 = scalar_lea.vmem [#allocation4], %s244
          %s247 = ssub.s32 4096, 4096
          %248 = vsyncadd %s242, %s247
          %s249 = smul.addr %s18, 64
          %s250 = smul.addr %s249, 64
          %s251 = scalar_lea.hbm %s2, %s250
          %s252 = sshll.u32 %s245, 4
          %s253 = int_to_ptr.vmem [resolvable:$true] %s252
          %258 = dma.hbm_to_vmem [thread:$0]  %s251, 4096, %s253, %s242, 128, 128, 8
        $region28: #{critic_forward.1} parent=19 // pred_fallthru
          _
        // Predicated region
        $region29: #{critic_forward.1} parent=19 // pred_check
          %p259 = pneg %p111
        $region30: #{critic_forward.1} parent=19 // pred_check_branch
          %261 = sbr.rel (%p259) target = $region32
        $region31: #{critic_forward.1} parent=19 // pred_region
          %s262 = sand.u32 %s18, 1
          %s263 = scalar_lea.sflag [#allocation5], %s262
          %s264 = sand.u32 %s101, 1
          %s265 = smul.addr %s264, 256
          %s266 = scalar_lea.vmem [#allocation6], %s265
          %s268 = ssub.s32 4096, 4096
          %269 = vsyncadd %s263, %s268
          %s270 = smul.addr %s18, 64
          %s271 = smul.addr %s270, 64
          %s272 = scalar_lea.hbm %s3, %s271
          %s273 = sshll.u32 %s266, 4
          %s274 = int_to_ptr.vmem [resolvable:$true] %s273
          %279 = dma.hbm_to_vmem [thread:$0]  %s272, 4096, %s274, %s263, 128, 128, 8
        $region32: #{critic_forward.1} parent=19 // pred_fallthru
          _
        // Predicated region
        $region33: #{critic_forward.1} parent=19 // pred_check
          %p280 = pneg %p137
        $region34: #{critic_forward.1} parent=19 // pred_check_branch
          %282 = sbr.rel (%p280) target = $region36
        $region35: #{critic_forward.1} parent=19 // pred_region
          %p283 = scmp.lt.s32.totalorder %s18, 1
          %s284 = scalar_select %p283, %s18, 1
          %s285 = smul.addr %s284, 2
          %s286 = scalar_lea.vmem %s4, %s285
        $region36: #{critic_forward.1} parent=19 // pred_fallthru
          _
        // Predicated region
        $region37: #{critic_forward.1} parent=19 // pred_check
          %p287 = pneg %p163
        $region38: #{critic_forward.1} parent=19 // pred_check_branch
          %289 = sbr.rel (%p287) target = $region40
        $region39: #{critic_forward.1} parent=19 // pred_region
          %s290 = smul.u32 2, %s18
          %p291 = scmp.lt.s32.totalorder %s290, 3
          %s292 = scalar_select %p291, %s290, 3
          %s293 = smul.addr %s292, 4
          %s294 = scalar_lea.vmem %s5, %s293
          %s295 = smul.u32 2, %s18
        $region40: #{critic_forward.1} parent=19 // pred_fallthru
          _
      $region20: #{critic_forward.1} parent=5 // pred_fallthru
        _
      %p296 = scmp.le.s32.totalorder 1, %s18
      %p297 = scmp.lt.s32.totalorder %s18, 3
      %p298 = pnand %p296, %p297
      %p299 = pneg %p298
      // Predicated region
      $region41: #{critic_forward.1} parent=5 // pred_check
        _
      $region42: #{critic_forward.1} parent=5 // pred_check_branch
        %301 = sbr.rel (%p298) target = $region44
      $region43: #{critic_forward.1} parent=5 // pred_region
        %s302 = ssub.s32 %s18, 1
        %s303 = sand.u32 %s52, 1
        %s304 = scalar_lea.sflag [#allocation3], %s303
        %s305 = sand.u32 %s52, 1
        %s306 = smul.addr %s305, 32
        %s307 = scalar_lea.vmem [#allocation2], %s306
        // Predicated region
        $region45: #{critic_forward.1} parent=43 // pred_check
          %p308 = pneg %p65
        $region46: #{critic_forward.1} parent=43 // pred_check_branch
          %310 = sbr.rel (%p308) target = $region48
        $region47: #{critic_forward.1} parent=43 // pred_region
          %311 = dma.done %s304, 512
        $region48: #{critic_forward.1} parent=43 // pred_fallthru
          _
        %s312 = sand.u32 %s23, 1
        %s313 = scalar_lea.sflag [#allocation5], %s312
        %s314 = sand.u32 %s78, 1
        %s315 = smul.addr %s314, 256
        %s316 = scalar_lea.vmem [#allocation4], %s315
        // Predicated region
        $region49: #{critic_forward.1} parent=43 // pred_check
          %p317 = pneg %p91
        $region50: #{critic_forward.1} parent=43 // pred_check_branch
          %319 = sbr.rel (%p317) target = $region52
        $region51: #{critic_forward.1} parent=43 // pred_region
          %320 = dma.done %s313, 4096
        $region52: #{critic_forward.1} parent=43 // pred_fallthru
          _
        %s321 = sand.u32 %s23, 1
        %s322 = scalar_lea.sflag [#allocation5], %s321
        %s323 = sand.u32 %s104, 1
        %s324 = smul.addr %s323, 256
        %s325 = scalar_lea.vmem [#allocation6], %s324
        // Predicated region
        $region53: #{critic_forward.1} parent=43 // pred_check
          %p326 = pneg %p117
        $region54: #{critic_forward.1} parent=43 // pred_check_branch
          %328 = sbr.rel (%p326) target = $region56
        $region55: #{critic_forward.1} parent=43 // pred_region
          %329 = dma.done %s322, 4096
        $region56: #{critic_forward.1} parent=43 // pred_fallthru
          _
        %p330 = pneg %p39
        %p331 = pneg %p36
        %s332 = sand.u32 %s52, 1
        %s333 = scalar_lea.sflag [#allocation3], %s332
        %s334 = sand.u32 %s52, 1
        %s335 = smul.addr %s334, 32
        %s336 = scalar_lea.vmem [#allocation2], %s335
        %p337 = pneg %p65
        %p338 = pneg %p62
        %s339 = sand.u32 %s23, 1
        %s340 = scalar_lea.sflag [#allocation5], %s339
        %s341 = sand.u32 %s78, 1
        %s342 = smul.addr %s341, 256
        %s343 = scalar_lea.vmem [#allocation4], %s342
        %p344 = pneg %p91
        %p345 = pneg %p88
        %s346 = sand.u32 %s23, 1
        %s347 = scalar_lea.sflag [#allocation5], %s346
        %s348 = sand.u32 %s104, 1
        %s349 = smul.addr %s348, 256
        %s350 = scalar_lea.vmem [#allocation6], %s349
        %p351 = pneg %p117
        %p352 = pneg %p114
        %p353 = scmp.lt.s32.totalorder %s23, 1
        %s354 = scalar_select %p353, %s23, 1
        %s355 = smul.addr %s354, 2
        %s356 = scalar_lea.vmem %s4, %s355
        %p357 = pneg %p143
        %p358 = pneg %p140
        %s359 = smul.u32 2, %s23
        %p360 = scmp.lt.s32.totalorder %s359, 3
        %s361 = scalar_select %p360, %s359, 3
        %s362 = smul.addr %s361, 4
        %s363 = scalar_lea.vmem %s5, %s362
        %p364 = pneg %p169
        %p365 = pneg %p166
        %p366 = pneg %p195
        %p367 = pneg %p192
        %p368 = scmp.lt.s32.totalorder %s23, 1
        %s369 = scalar_select %p368, %s23, 1
        %s370 = smul.addr %s369, 2
        %s371 = smul.addr %s370, 8
        %s372 = scalar_lea.vmem %s6, %s371
        %s373 = smul.u32 2, %s23
        %p374 = scmp.lt.s32.totalorder %s23, 1
        %s375 = scalar_select %p374, %s23, 1
        %s376 = smul.addr %s375, 2
        %s377 = scalar_lea.vmem %s4, %s376
        %s378 = smul.u32 2, %s23
        %p379 = scmp.lt.s32.totalorder %s378, 3
        %s380 = scalar_select %p379, %s378, 3
        %s381 = smul.addr %s380, 4
        %s382 = scalar_lea.vmem %s5, %s381
        %s383 = smul.u32 2, %s23
        %p384 = scmp.lt.s32.totalorder %s23, 1
        %s385 = scalar_select %p384, %s23, 1
        %s386 = smul.addr %s385, 2
        %s387 = smul.addr %s386, 8
        %s388 = scalar_lea.vmem %s6, %s387
        %v390 = vld [vmem:[%s0] sm:$0xf]
        %v391 = vld [vmem:[%s0 + $0x4] sm:$0xf]
        %v392 = vld [vmem:[%s382] sm:$0xff]
        %v393 = vld [vmem:[%s307] sm:$0xff]
        %v394 = vld [vmem:[%s307 + $0x8] sm:$0xff]
        %v395 = vld [vmem:[%s307 + $0x10] sm:$0xff]
        %v396 = vld [vmem:[%s307 + $0x18] sm:$0xff]
        %v398 = vlaneseq
        %v399 = vshrl.u32 %v398, 7
        %v400 = vsub.s32 0, %v399
        %v401 = vrot.slane %v392, %v400
        %v402 = vlaneseq
        %v403 = vshrl.u32 %v402, 7
        %v404 = vsub.s32 4, %v403
        %v405 = vrot.slane %v392, %v404
        %v408 = vlaneseq
        %v409 = vshrl.u32 %v408, 7
        %v410 = vsub.s32 0, %v409
        %v411 = vrot.slane %v401, %v410
        %v412 = vlaneseq
        %v413 = vshrl.u32 %v412, 7
        %v414 = vsub.s32 0, %v413
        %v415 = vrot.slane %v405, %v414
        %v418 = vunpack.c.l.b16 %v390
        %v419 = vunpack.c.l.b16 %v391
        %v420 = vpack.c.b16 %v419, %v418
        %v425 = vunpack.c.l.b16 %v393
        %v426 = vunpack.c.h.b16 %v393
        %v427 = vunpack.c.l.b16 %v394
        %v428 = vunpack.c.h.b16 %v394
        %v429 = vunpack.c.l.b16 %v395
        %v430 = vunpack.c.h.b16 %v395
        %v431 = vunpack.c.l.b16 %v396
        %v432 = vunpack.c.h.b16 %v396
        %v433 = vpack.c.b16 %v427, %v425
        %v434 = vpack.c.b16 %v428, %v426
        %v435 = vpack.c.b16 %v431, %v429
        %v436 = vpack.c.b16 %v432, %v430
        %vm441 = vcmask 261120
        %v443 = vsel %vm441, %v420, 0
        %445 = vmatprep.subr.bf16.mxu0 %v434
        %446 = vmatpush1.bf16.msra.mxu0 %v433
        %447 = vmatprep.subr.bf16.mxu0 %v436
        %448 = vmatpush1.bf16.msra.mxu0 %v435
        %449 = vmatprep.subr.bf16.mxu0 0
        %450 = vmatpush1.bf16.msra.mxu0 0
        %451 = vmatprep.subr.bf16.mxu0 0
        %452 = vmatpush1.bf16.msra.mxu0 0
        %453 = vmatprep.subr.bf16.mxu0 0
        %454 = vmatpush1.bf16.msra.mxu0 0
        %455 = vmatprep.subr.bf16.mxu0 0
        %456 = vmatpush1.bf16.msra.mxu0 0
        %457 = vmatprep.subr.bf16.mxu0 0
        %458 = vmatpush1.bf16.msra.mxu0 0
        %459 = vmatprep.subr.bf16.mxu0 0
        %460 = vmatpush1.bf16.msra.mxu0 0
        %461 = vmatprep.subr.bf16.mxu0 0
        %462 = vmatpush1.bf16.msra.mxu0 0
        %463 = vmatprep.subr.bf16.mxu0 0
        %464 = vmatpush1.bf16.msra.mxu0 0
        %465 = vmatprep.subr.bf16.mxu0 0
        %466 = vmatpush1.bf16.msra.mxu0 0
        %467 = vmatprep.subr.bf16.mxu0 0
        %468 = vmatpush1.bf16.msra.mxu0 0
        %469 = vmatprep.subr.bf16.mxu0 0
        %470 = vmatpush1.bf16.msra.mxu0 0
        %471 = vmatprep.subr.bf16.mxu0 0
        %472 = vmatpush1.bf16.msra.mxu0 0
        %473 = vmatprep.subr.bf16.mxu0 0
        %474 = vmatpush1.bf16.msra.mxu0 0
        %475 = vmatprep.subr.bf16.mxu0 0
        %476 = vmatpush1.bf16.msra.mxu0 0
        %477 = vmatprep.mubr.bf16.mxu0 0
        %478 = vmatmul.mubr.bf16.gmra.mrb[0].mxu0 %v443
        %v479 = vpop.f32.mrb[0].mxu0
        %v480 = vadd.f32 %v411, %v479
        %v481 = vpop.f32.mrb[0].mxu0
        %v482 = vadd.f32 %v415, %v481
        %v483 = vpop.f32.mrb[0].mxu0
        %v484 = vadd.f32 %v411, %v483
        %v485 = vpop.f32.mrb[0].mxu0
        %v486 = vadd.f32 %v415, %v485
        %487 = vdwg.mxu0
        %v488 = vmax.f32 %v480, 0.0
        %v489 = vmax.f32 %v482, 0.0
        %v490 = vmax.f32 %v484, 0.0
        %v491 = vmax.f32 %v486, 0.0
        %v492 = vpack.c.bf16 %v490, %v488
        %v493 = vpack.c.bf16 %v491, %v489
        %v494 = vld [vmem:[%s316] sm:$0xff]
        %v495 = vld [vmem:[%s316 + $0x8] sm:$0xff]
        %v496 = vld [vmem:[%s316 + $0x10] sm:$0xff]
        %v497 = vld [vmem:[%s316 + $0x18] sm:$0xff]
        %v498 = vld [vmem:[%s316 + $0x20] sm:$0xff]
        %v499 = vld [vmem:[%s316 + $0x28] sm:$0xff]
        %v500 = vld [vmem:[%s316 + $0x30] sm:$0xff]
        %v501 = vld [vmem:[%s316 + $0x38] sm:$0xff]
        %v502 = vld [vmem:[%s316 + $0x40] sm:$0xff]
        %v503 = vld [vmem:[%s316 + $0x48] sm:$0xff]
        %v504 = vld [vmem:[%s316 + $0x50] sm:$0xff]
        %v505 = vld [vmem:[%s316 + $0x58] sm:$0xff]
        %v506 = vld [vmem:[%s316 + $0x60] sm:$0xff]
        %v507 = vld [vmem:[%s316 + $0x68] sm:$0xff]
        %v508 = vld [vmem:[%s316 + $0x70] sm:$0xff]
        %v509 = vld [vmem:[%s316 + $0x78] sm:$0xff]
        %v510 = vld [vmem:[%s316 + $0x80] sm:$0xff]
        %v511 = vld [vmem:[%s316 + $0x88] sm:$0xff]
        %v512 = vld [vmem:[%s316 + $0x90] sm:$0xff]
        %v513 = vld [vmem:[%s316 + $0x98] sm:$0xff]
        %v514 = vld [vmem:[%s316 + $0xa0] sm:$0xff]
        %v515 = vld [vmem:[%s316 + $0xa8] sm:$0xff]
        %v516 = vld [vmem:[%s316 + $0xb0] sm:$0xff]
        %v517 = vld [vmem:[%s316 + $0xb8] sm:$0xff]
        %v518 = vld [vmem:[%s316 + $0xc0] sm:$0xff]
        %v519 = vld [vmem:[%s316 + $0xc8] sm:$0xff]
        %v520 = vld [vmem:[%s316 + $0xd0] sm:$0xff]
        %v521 = vld [vmem:[%s316 + $0xd8] sm:$0xff]
        %v522 = vld [vmem:[%s316 + $0xe0] sm:$0xff]
        %v523 = vld [vmem:[%s316 + $0xe8] sm:$0xff]
        %v524 = vld [vmem:[%s316 + $0xf0] sm:$0xff]
        %v525 = vld [vmem:[%s316 + $0xf8] sm:$0xff]
        %v526 = vlaneseq
        %v527 = vshrl.u32 %v526, 7
        %v528 = vsub.s32 1, %v527
        %v529 = vrot.slane %v392, %v528
        %v530 = vlaneseq
        %v531 = vshrl.u32 %v530, 7
        %v532 = vsub.s32 5, %v531
        %v533 = vrot.slane %v392, %v532
        %v536 = vlaneseq
        %v537 = vshrl.u32 %v536, 7
        %v538 = vsub.s32 1, %v537
        %v539 = vrot.slane %v529, %v538
        %v540 = vlaneseq
        %v541 = vshrl.u32 %v540, 7
        %v542 = vsub.s32 1, %v541
        %v543 = vrot.slane %v533, %v542
        %v576 = vunpack.c.l.b16 %v494
        %v577 = vunpack.c.h.b16 %v494
        %v578 = vunpack.c.l.b16 %v495
        %v579 = vunpack.c.h.b16 %v495
        %v580 = vunpack.c.l.b16 %v496
        %v581 = vunpack.c.h.b16 %v496
        %v582 = vunpack.c.l.b16 %v497
        %v583 = vunpack.c.h.b16 %v497
        %v584 = vunpack.c.l.b16 %v498
        %v585 = vunpack.c.h.b16 %v498
        %v586 = vunpack.c.l.b16 %v499
        %v587 = vunpack.c.h.b16 %v499
        %v588 = vunpack.c.l.b16 %v500
        %v589 = vunpack.c.h.b16 %v500
        %v590 = vunpack.c.l.b16 %v501
        %v591 = vunpack.c.h.b16 %v501
        %v592 = vunpack.c.l.b16 %v502
        %v593 = vunpack.c.h.b16 %v502
        %v594 = vunpack.c.l.b16 %v503
        %v595 = vunpack.c.h.b16 %v503
        %v596 = vunpack.c.l.b16 %v504
        %v597 = vunpack.c.h.b16 %v504
        %v598 = vunpack.c.l.b16 %v505
        %v599 = vunpack.c.h.b16 %v505
        %v600 = vunpack.c.l.b16 %v506
        %v601 = vunpack.c.h.b16 %v506
        %v602 = vunpack.c.l.b16 %v507
        %v603 = vunpack.c.h.b16 %v507
        %v604 = vunpack.c.l.b16 %v508
        %v605 = vunpack.c.h.b16 %v508
        %v606 = vunpack.c.l.b16 %v509
        %v607 = vunpack.c.h.b16 %v509
        %v608 = vunpack.c.l.b16 %v510
        %v609 = vunpack.c.h.b16 %v510
        %v610 = vunpack.c.l.b16 %v511
        %v611 = vunpack.c.h.b16 %v511
        %v612 = vunpack.c.l.b16 %v512
        %v613 = vunpack.c.h.b16 %v512
        %v614 = vunpack.c.l.b16 %v513
        %v615 = vunpack.c.h.b16 %v513
        %v616 = vunpack.c.l.b16 %v514
        %v617 = vunpack.c.h.b16 %v514
        %v618 = vunpack.c.l.b16 %v515
        %v619 = vunpack.c.h.b16 %v515
        %v620 = vunpack.c.l.b16 %v516
        %v621 = vunpack.c.h.b16 %v516
        %v622 = vunpack.c.l.b16 %v517
        %v623 = vunpack.c.h.b16 %v517
        %v624 = vunpack.c.l.b16 %v518
        %v625 = vunpack.c.h.b16 %v518
        %v626 = vunpack.c.l.b16 %v519
        %v627 = vunpack.c.h.b16 %v519
        %v628 = vunpack.c.l.b16 %v520
        %v629 = vunpack.c.h.b16 %v520
        %v630 = vunpack.c.l.b16 %v521
        %v631 = vunpack.c.h.b16 %v521
        %v632 = vunpack.c.l.b16 %v522
        %v633 = vunpack.c.h.b16 %v522
        %v634 = vunpack.c.l.b16 %v523
        %v635 = vunpack.c.h.b16 %v523
        %v636 = vunpack.c.l.b16 %v524
        %v637 = vunpack.c.h.b16 %v524
        %v638 = vunpack.c.l.b16 %v525
        %v639 = vunpack.c.h.b16 %v525
        %v640 = vpack.c.b16 %v578, %v576
        %v641 = vpack.c.b16 %v579, %v577
        %v642 = vpack.c.b16 %v582, %v580
        %v643 = vpack.c.b16 %v583, %v581
        %v644 = vpack.c.b16 %v586, %v584
        %v645 = vpack.c.b16 %v587, %v585
        %v646 = vpack.c.b16 %v590, %v588
        %v647 = vpack.c.b16 %v591, %v589
        %v648 = vpack.c.b16 %v594, %v592
        %v649 = vpack.c.b16 %v595, %v593
        %v650 = vpack.c.b16 %v598, %v596
        %v651 = vpack.c.b16 %v599, %v597
        %v652 = vpack.c.b16 %v602, %v600
        %v653 = vpack.c.b16 %v603, %v601
        %v654 = vpack.c.b16 %v606, %v604
        %v655 = vpack.c.b16 %v607, %v605
        %v656 = vpack.c.b16 %v610, %v608
        %v657 = vpack.c.b16 %v611, %v609
        %v658 = vpack.c.b16 %v614, %v612
        %v659 = vpack.c.b16 %v615, %v613
        %v660 = vpack.c.b16 %v618, %v616
        %v661 = vpack.c.b16 %v619, %v617
        %v662 = vpack.c.b16 %v622, %v620
        %v663 = vpack.c.b16 %v623, %v621
        %v664 = vpack.c.b16 %v626, %v624
        %v665 = vpack.c.b16 %v627, %v625
        %v666 = vpack.c.b16 %v630, %v628
        %v667 = vpack.c.b16 %v631, %v629
        %v668 = vpack.c.b16 %v634, %v632
        %v669 = vpack.c.b16 %v635, %v633
        %v670 = vpack.c.b16 %v638, %v636
        %v671 = vpack.c.b16 %v639, %v637
        %704 = vmatprep.subr.bf16.mxu0 %v641
        %705 = vmatpush1.bf16.msra.mxu0 %v640
        %706 = vmatprep.subr.bf16.mxu0 %v643
        %707 = vmatpush1.bf16.msra.mxu0 %v642
        %708 = vmatprep.subr.bf16.mxu0 %v645
        %709 = vmatpush1.bf16.msra.mxu0 %v644
        %710 = vmatprep.subr.bf16.mxu0 %v647
        %711 = vmatpush1.bf16.msra.mxu0 %v646
        %712 = vmatprep.subr.bf16.mxu0 %v649
        %713 = vmatpush1.bf16.msra.mxu0 %v648
        %714 = vmatprep.subr.bf16.mxu0 %v651
        %715 = vmatpush1.bf16.msra.mxu0 %v650
        %716 = vmatprep.subr.bf16.mxu0 %v653
        %717 = vmatpush1.bf16.msra.mxu0 %v652
        %718 = vmatprep.subr.bf16.mxu0 %v655
        %719 = vmatpush1.bf16.msra.mxu0 %v654
        %720 = vmatprep.subr.bf16.mxu0 %v657
        %721 = vmatpush1.bf16.msra.mxu0 %v656
        %722 = vmatprep.subr.bf16.mxu0 %v659
        %723 = vmatpush1.bf16.msra.mxu0 %v658
        %724 = vmatprep.subr.bf16.mxu0 %v661
        %725 = vmatpush1.bf16.msra.mxu0 %v660
        %726 = vmatprep.subr.bf16.mxu0 %v663
        %727 = vmatpush1.bf16.msra.mxu0 %v662
        %728 = vmatprep.subr.bf16.mxu0 %v665
        %729 = vmatpush1.bf16.msra.mxu0 %v664
        %730 = vmatprep.subr.bf16.mxu0 %v667
        %731 = vmatpush1.bf16.msra.mxu0 %v666
        %732 = vmatprep.subr.bf16.mxu0 %v669
        %733 = vmatpush1.bf16.msra.mxu0 %v668
        %734 = vmatprep.subr.bf16.mxu0 %v671
        %735 = vmatpush1.bf16.msra.mxu0 %v670
        %736 = vmatprep.mubr.bf16.mxu0 %v493
        %737 = vmatmul.mubr.bf16.gmra.mrb[0].mxu0 %v492
        %v738 = vpop.f32.mrb[0].mxu0
        %v739 = vadd.f32 %v539, %v738
        %v740 = vpop.f32.mrb[0].mxu0
        %v741 = vadd.f32 %v543, %v740
        %v742 = vpop.f32.mrb[0].mxu0
        %v743 = vadd.f32 %v539, %v742
        %v744 = vpop.f32.mrb[0].mxu0
        %v745 = vadd.f32 %v543, %v744
        %746 = vdwg.mxu0
        %v747 = vmax.f32 %v739, 0.0
        %v748 = vmax.f32 %v741, 0.0
        %v749 = vmax.f32 %v743, 0.0
        %v750 = vmax.f32 %v745, 0.0
        %v751 = vpack.c.bf16 %v749, %v747
        %v752 = vpack.c.bf16 %v750, %v748
        %v753 = vld [vmem:[%s325] sm:$0xff]
        %v754 = vld [vmem:[%s325 + $0x8] sm:$0xff]
        %v755 = vld [vmem:[%s325 + $0x10] sm:$0xff]
        %v756 = vld [vmem:[%s325 + $0x18] sm:$0xff]
        %v757 = vld [vmem:[%s325 + $0x20] sm:$0xff]
        %v758 = vld [vmem:[%s325 + $0x28] sm:$0xff]
        %v759 = vld [vmem:[%s325 + $0x30] sm:$0xff]
        %v760 = vld [vmem:[%s325 + $0x38] sm:$0xff]
        %v761 = vld [vmem:[%s325 + $0x40] sm:$0xff]
        %v762 = vld [vmem:[%s325 + $0x48] sm:$0xff]
        %v763 = vld [vmem:[%s325 + $0x50] sm:$0xff]
        %v764 = vld [vmem:[%s325 + $0x58] sm:$0xff]
        %v765 = vld [vmem:[%s325 + $0x60] sm:$0xff]
        %v766 = vld [vmem:[%s325 + $0x68] sm:$0xff]
        %v767 = vld [vmem:[%s325 + $0x70] sm:$0xff]
        %v768 = vld [vmem:[%s325 + $0x78] sm:$0xff]
        %v769 = vld [vmem:[%s325 + $0x80] sm:$0xff]
        %v770 = vld [vmem:[%s325 + $0x88] sm:$0xff]
        %v771 = vld [vmem:[%s325 + $0x90] sm:$0xff]
        %v772 = vld [vmem:[%s325 + $0x98] sm:$0xff]
        %v773 = vld [vmem:[%s325 + $0xa0] sm:$0xff]
        %v774 = vld [vmem:[%s325 + $0xa8] sm:$0xff]
        %v775 = vld [vmem:[%s325 + $0xb0] sm:$0xff]
        %v776 = vld [vmem:[%s325 + $0xb8] sm:$0xff]
        %v777 = vld [vmem:[%s325 + $0xc0] sm:$0xff]
        %v778 = vld [vmem:[%s325 + $0xc8] sm:$0xff]
        %v779 = vld [vmem:[%s325 + $0xd0] sm:$0xff]
        %v780 = vld [vmem:[%s325 + $0xd8] sm:$0xff]
        %v781 = vld [vmem:[%s325 + $0xe0] sm:$0xff]
        %v782 = vld [vmem:[%s325 + $0xe8] sm:$0xff]
        %v783 = vld [vmem:[%s325 + $0xf0] sm:$0xff]
        %v784 = vld [vmem:[%s325 + $0xf8] sm:$0xff]
        %v785 = vlaneseq
        %v786 = vshrl.u32 %v785, 7
        %v787 = vsub.s32 2, %v786
        %v788 = vrot.slane %v392, %v787
        %v789 = vlaneseq
        %v790 = vshrl.u32 %v789, 7
        %v791 = vsub.s32 6, %v790
        %v792 = vrot.slane %v392, %v791
        %v795 = vlaneseq
        %v796 = vshrl.u32 %v795, 7
        %v797 = vsub.s32 2, %v796
        %v798 = vrot.slane %v788, %v797
        %v799 = vlaneseq
        %v800 = vshrl.u32 %v799, 7
        %v801 = vsub.s32 2, %v800
        %v802 = vrot.slane %v792, %v801
        %v835 = vunpack.c.l.b16 %v753
        %v836 = vunpack.c.h.b16 %v753
        %v837 = vunpack.c.l.b16 %v754
        %v838 = vunpack.c.h.b16 %v754
        %v839 = vunpack.c.l.b16 %v755
        %v840 = vunpack.c.h.b16 %v755
        %v841 = vunpack.c.l.b16 %v756
        %v842 = vunpack.c.h.b16 %v756
        %v843 = vunpack.c.l.b16 %v757
        %v844 = vunpack.c.h.b16 %v757
        %v845 = vunpack.c.l.b16 %v758
        %v846 = vunpack.c.h.b16 %v758
        %v847 = vunpack.c.l.b16 %v759
        %v848 = vunpack.c.h.b16 %v759
        %v849 = vunpack.c.l.b16 %v760
        %v850 = vunpack.c.h.b16 %v760
        %v851 = vunpack.c.l.b16 %v761
        %v852 = vunpack.c.h.b16 %v761
        %v853 = vunpack.c.l.b16 %v762
        %v854 = vunpack.c.h.b16 %v762
        %v855 = vunpack.c.l.b16 %v763
        %v856 = vunpack.c.h.b16 %v763
        %v857 = vunpack.c.l.b16 %v764
        %v858 = vunpack.c.h.b16 %v764
        %v859 = vunpack.c.l.b16 %v765
        %v860 = vunpack.c.h.b16 %v765
        %v861 = vunpack.c.l.b16 %v766
        %v862 = vunpack.c.h.b16 %v766
        %v863 = vunpack.c.l.b16 %v767
        %v864 = vunpack.c.h.b16 %v767
        %v865 = vunpack.c.l.b16 %v768
        %v866 = vunpack.c.h.b16 %v768
        %v867 = vunpack.c.l.b16 %v769
        %v868 = vunpack.c.h.b16 %v769
        %v869 = vunpack.c.l.b16 %v770
        %v870 = vunpack.c.h.b16 %v770
        %v871 = vunpack.c.l.b16 %v771
        %v872 = vunpack.c.h.b16 %v771
        %v873 = vunpack.c.l.b16 %v772
        %v874 = vunpack.c.h.b16 %v772
        %v875 = vunpack.c.l.b16 %v773
        %v876 = vunpack.c.h.b16 %v773
        %v877 = vunpack.c.l.b16 %v774
        %v878 = vunpack.c.h.b16 %v774
        %v879 = vunpack.c.l.b16 %v775
        %v880 = vunpack.c.h.b16 %v775
        %v881 = vunpack.c.l.b16 %v776
        %v882 = vunpack.c.h.b16 %v776
        %v883 = vunpack.c.l.b16 %v777
        %v884 = vunpack.c.h.b16 %v777
        %v885 = vunpack.c.l.b16 %v778
        %v886 = vunpack.c.h.b16 %v778
        %v887 = vunpack.c.l.b16 %v779
        %v888 = vunpack.c.h.b16 %v779
        %v889 = vunpack.c.l.b16 %v780
        %v890 = vunpack.c.h.b16 %v780
        %v891 = vunpack.c.l.b16 %v781
        %v892 = vunpack.c.h.b16 %v781
        %v893 = vunpack.c.l.b16 %v782
        %v894 = vunpack.c.h.b16 %v782
        %v895 = vunpack.c.l.b16 %v783
        %v896 = vunpack.c.h.b16 %v783
        %v897 = vunpack.c.l.b16 %v784
        %v898 = vunpack.c.h.b16 %v784
        %v899 = vpack.c.b16 %v837, %v835
        %v900 = vpack.c.b16 %v838, %v836
        %v901 = vpack.c.b16 %v841, %v839
        %v902 = vpack.c.b16 %v842, %v840
        %v903 = vpack.c.b16 %v845, %v843
        %v904 = vpack.c.b16 %v846, %v844
        %v905 = vpack.c.b16 %v849, %v847
        %v906 = vpack.c.b16 %v850, %v848
        %v907 = vpack.c.b16 %v853, %v851
        %v908 = vpack.c.b16 %v854, %v852
        %v909 = vpack.c.b16 %v857, %v855
        %v910 = vpack.c.b16 %v858, %v856
        %v911 = vpack.c.b16 %v861, %v859
        %v912 = vpack.c.b16 %v862, %v860
        %v913 = vpack.c.b16 %v865, %v863
        %v914 = vpack.c.b16 %v866, %v864
        %v915 = vpack.c.b16 %v869, %v867
        %v916 = vpack.c.b16 %v870, %v868
        %v917 = vpack.c.b16 %v873, %v871
        %v918 = vpack.c.b16 %v874, %v872
        %v919 = vpack.c.b16 %v877, %v875
        %v920 = vpack.c.b16 %v878, %v876
        %v921 = vpack.c.b16 %v881, %v879
        %v922 = vpack.c.b16 %v882, %v880
        %v923 = vpack.c.b16 %v885, %v883
        %v924 = vpack.c.b16 %v886, %v884
        %v925 = vpack.c.b16 %v889, %v887
        %v926 = vpack.c.b16 %v890, %v888
        %v927 = vpack.c.b16 %v893, %v891
        %v928 = vpack.c.b16 %v894, %v892
        %v929 = vpack.c.b16 %v897, %v895
        %v930 = vpack.c.b16 %v898, %v896
        %963 = vmatprep.subr.bf16.mxu0 %v900
        %964 = vmatpush1.bf16.msra.mxu0 %v899
        %965 = vmatprep.subr.bf16.mxu0 %v902
        %966 = vmatpush1.bf16.msra.mxu0 %v901
        %967 = vmatprep.subr.bf16.mxu0 %v904
        %968 = vmatpush1.bf16.msra.mxu0 %v903
        %969 = vmatprep.subr.bf16.mxu0 %v906
        %970 = vmatpush1.bf16.msra.mxu0 %v905
        %971 = vmatprep.subr.bf16.mxu0 %v908
        %972 = vmatpush1.bf16.msra.mxu0 %v907
        %973 = vmatprep.subr.bf16.mxu0 %v910
        %974 = vmatpush1.bf16.msra.mxu0 %v909
        %975 = vmatprep.subr.bf16.mxu0 %v912
        %976 = vmatpush1.bf16.msra.mxu0 %v911
        %977 = vmatprep.subr.bf16.mxu0 %v914
        %978 = vmatpush1.bf16.msra.mxu0 %v913
        %979 = vmatprep.subr.bf16.mxu0 %v916
        %980 = vmatpush1.bf16.msra.mxu0 %v915
        %981 = vmatprep.subr.bf16.mxu0 %v918
        %982 = vmatpush1.bf16.msra.mxu0 %v917
        %983 = vmatprep.subr.bf16.mxu0 %v920
        %984 = vmatpush1.bf16.msra.mxu0 %v919
        %985 = vmatprep.subr.bf16.mxu0 %v922
        %986 = vmatpush1.bf16.msra.mxu0 %v921
        %987 = vmatprep.subr.bf16.mxu0 %v924
        %988 = vmatpush1.bf16.msra.mxu0 %v923
        %989 = vmatprep.subr.bf16.mxu0 %v926
        %990 = vmatpush1.bf16.msra.mxu0 %v925
        %991 = vmatprep.subr.bf16.mxu0 %v928
        %992 = vmatpush1.bf16.msra.mxu0 %v927
        %993 = vmatprep.subr.bf16.mxu0 %v930
        %994 = vmatpush1.bf16.msra.mxu0 %v929
        %995 = vmatprep.mubr.bf16.mxu0 %v752
        %996 = vmatmul.mubr.bf16.gmra.mrb[0].mxu0 %v751
        %v997 = vpop.f32.mrb[0].mxu0
        %v998 = vadd.f32 %v798, %v997
        %v999 = vpop.f32.mrb[0].mxu0
        %v1000 = vadd.f32 %v802, %v999
        %v1001 = vpop.f32.mrb[0].mxu0
        %v1002 = vadd.f32 %v798, %v1001
        %v1003 = vpop.f32.mrb[0].mxu0
        %v1004 = vadd.f32 %v802, %v1003
        %1005 = vdwg.mxu0
        %v1006 = vmax.f32 %v998, 0.0
        %v1007 = vmax.f32 %v1000, 0.0
        %v1008 = vmax.f32 %v1002, 0.0
        %v1009 = vmax.f32 %v1004, 0.0
        %v1010 = vld [vmem:[%s377] sm:$0x3]
        %v1012 = vlaneseq
        %v1013 = vshrl.u32 %v1012, 7
        %v1014 = vsub.s32 0, %v1013
        %v1015 = vrot.slane %v1010, %v1014
        %v1016 = vlaneseq
        %v1017 = vshrl.u32 %v1016, 7
        %v1018 = vsub.s32 1, %v1017
        %v1019 = vrot.slane %v1010, %v1018
        %v1022 = vmul.f32 %v1006, %v1015
        %v1023 = vmul.f32 %v1007, %v1019
        %v1024 = vmul.f32 %v1008, %v1015
        %v1025 = vmul.f32 %v1009, %v1019
        %v1026 = vadd.f32 %v1022, %v1023
        %1027 = vadd.xlane.f32.xlu0 %v1026
        %v1028 = vpop.xlane.xlu0 %1027
        %v1029 = vadd.f32 %v1024, %v1025
        %1030 = vadd.xlane.f32.xlu0 %v1029
        %v1031 = vpop.xlane.xlu0 %1030
        %v1032 = vlaneseq
        %v1033 = vshrl.u32 %v1032, 7
        %v1034 = vsub.s32 3, %v1033
        %v1035 = vrot.slane %v392, %v1034
        %v1036 = vadd.f32 %v1028, %v1035
        %v1037 = vadd.f32 %v1031, %v1035
        %vm1038 = vcmask 7168
        %1039 = vst.msk [vmem:[%s388] sm:$0xff] %vm1038, %v1036
        %1040 = vst.msk [vmem:[%s388 + $0x8] sm:$0xff] %vm1038, %v1037
        %p1041 = scmp.lt.s32.totalorder %s23, 1
        %s1042 = scalar_select %p1041, %s23, 1
        %s1043 = smul.addr %s1042, 2
        %s1044 = smul.addr %s1043, 8
        %s1045 = scalar_lea.vmem %s6, %s1044
        // Predicated region
        $region57: #{critic_forward.1} parent=43 // pred_check
          %p1046 = pneg %p192
        $region58: #{critic_forward.1} parent=43 // pred_check_branch
          %1048 = sbr.rel (%p1046) target = $region60
        $region59: #{critic_forward.1} parent=43 // pred_region
          _
        $region60: #{critic_forward.1} parent=43 // pred_fallthru
          _
      $region44: #{critic_forward.1} parent=5 // pred_fallthru
        _
      %p1049 = scmp.le.s32.totalorder 2, %s18
      // Predicated region
      $region61: #{critic_forward.1} parent=5 // pred_check
        %p1050 = pneg %p1049
      $region62: #{critic_forward.1} parent=5 // pred_check_branch
        %1052 = sbr.rel (%p1050) target = $region64
      $region63: #{critic_forward.1} parent=5 // pred_region
        %s1053 = ssub.s32 %s18, 2
        // Predicated region
        $region65: #{critic_forward.1} parent=63 // pred_check
          %p1054 = pneg %p198
        $region66: #{critic_forward.1} parent=63 // pred_check_branch
          %1056 = sbr.rel (%p1054) target = $region68
        $region67: #{critic_forward.1} parent=63 // pred_region
          %p1057 = scmp.lt.s32.totalorder %s24, 1
          %s1058 = scalar_select %p1057, %s24, 1
          %s1059 = smul.addr %s1058, 2
          %s1060 = smul.addr %s1059, 8
          %s1061 = scalar_lea.vmem %s6, %s1060
        $region68: #{critic_forward.1} parent=63 // pred_fallthru
          _
      $region64: #{critic_forward.1} parent=5 // pred_fallthru
        _
    $region6: #{critic_forward.1} parent=1 // loop_footer
      %s22 = sadd.s32 1, %s18
    $region7: #{critic_forward.1} parent=1 // loop_footer_branch
      %17 = sbr.rel target = $region3
    $region8: #{critic_forward.1} parent=1 // loop_exit
      _
    %1062 = vsyncpa [#allocation3], 1
    %s1063 = scalar_lea.sflag [#allocation3], 1
    %1064 = vsyncpa %s1063, 1
    %1065 = vsyncpa [#allocation5], 1
    %s1066 = scalar_lea.sflag [#allocation5], 1
    %1067 = vsyncpa %s1066, 1

</llo_original>
